<compile_context>
chip_gen: v5e
topology: v5e:2x2
jax: 0.10.0
libtpu: 0.0.40
codegen_flags: <defaults>
</compile_context>

<pallas_src>
import math
import functools

import jax
import jax.numpy as jnp
from jax.experimental import pallas as pl
from jax.experimental.pallas import tpu as pltpu


def _multipole_kernel(pos_ref, mom_ref, out_ref, *, elements, dim):
    """pos_ref/mom_ref/out_ref: (P, tile_r, 128) VMEM blocks, each plane dense.

    pos planes: (x,)           if dim == 2, (x, y)   if dim > 2   (read only)
    mom planes: (px,)          if dim == 2, (px, py) if dim > 2   (read/write)
    """
    x = pos_ref[0]                                  # (tile_r, 128) dense
    px = mom_ref[0]
    if dim > 2:
        y = pos_ref[1]
        py = mom_ref[1]

    # Hoist the zn polynomials out of the element loop: x / y are invariant
    # across the fused chain (only momenta change), so evaluate each distinct
    # order once.  `elements` is static -> everything unrolls at trace time.
    orders = sorted({int(o) for o, _, _ in elements})
    zn = {}
    for order in orders:
        if dim > 2:
            if order == 3:
                zr = x * x - y * y
                zi = 2.0 * x * y
            elif order == 4:
                zr = x * x * x - 3.0 * y * y * x
                zi = -(y * y * y) + 3.0 * x * x * y
            elif order == 5:
                x2 = x * x
                y2 = y * y
                zr = x2 * x2 - 6.0 * x2 * y2 + y2 * y2
                zi = 4.0 * x2 * x * y - 4.0 * x * y2 * y
            else:
                # Reference module's if/elif chain only reaches order 3/4/5.
                raise ValueError("MultipoleTransform kernel supports order in {3,4,5}.")
        else:
            # dim == 2: y == 0, so the imaginary part vanishes identically.
            if order == 3:
                zr = x * x
            elif order == 4:
                zr = x * x * x
            elif order == 5:
                x2 = x * x
                zr = x2 * x2
            else:
                raise ValueError("MultipoleTransform kernel supports order in {3,4,5}.")
            zi = None
        zn[order] = (zr, zi)

    for order, strength, skew in elements:
        k = float(strength) / float(math.factorial(order - 1))
        zr, zi = zn[order]
        if skew:
            if zi is not None:
                px = px + k * zi
            if dim > 2:
                py = py + k * zr
        else:
            if dim > 2:
                # NOTE: reference uses X[:, 1] (pre-update px), NOT X[:, 3], here;
                # reproduced exactly (likely a bug in the original module).
                py = px + k * zi
            px = px - k * zr

    # Dense, unmasked full-plane stores of only the updated momentum rows.
    out_ref[0] = px
    if dim > 2:
        out_ref[1] = py


def _choose_tile_r(r, max_tile_r=512):
    """Sublane-row tile.  Multiple of 8 (or full R), <= 512 rows = 64K particles."""
    if r <= 8:
        return r                                     # single full block
    half = (r + 1) // 2                              # >= 2 grid steps -> 2 TCs on v7x
    tile = max(8, min(int(max_tile_r), half))
    tile = ((tile + 7) // 8) * 8
    return min(tile, r)


def multipole_kicks_planar(pos, mom, elements, *, max_tile_r=512):
    """Fused chain of multipole kicks on the persistent planar state.

    pos: (P, R, 128) read-only position planes  (x,) or (x, y).
    mom: (P, R, 128) momentum planes (px,) or (px, py); updated in place
         (aliased with the output).
    elements: static sequence of (order, strength, skew) tuples, applied in order.
    Returns the new momentum planes, shape (P, R, 128).
    """
    P, R, L = pos.shape
    assert L == 128 and mom.shape == pos.shape and P in (1, 2)
    tile_r = _choose_tile_r(R, max_tile_r)
    grid = (pl.cdiv(R, tile_r),)

    kern = functools.partial(_multipole_kernel, elements=tuple(elements), dim=2 * P)
    return pl.pallas_call(
        kern,
        out_shape=jax.ShapeDtypeStruct((P, R, 128), mom.dtype),
        grid=grid,
        in_specs=[
            pl.BlockSpec((P, tile_r, 128), lambda i: (0, i, 0)),   # positions
            pl.BlockSpec((P, tile_r, 128), lambda i: (0, i, 0)),   # momenta
        ],
        out_specs=pl.BlockSpec((P, tile_r, 128), lambda i: (0, i, 0)),
        input_output_aliases={1: 0},                 # momenta updated in place
        compiler_params=pltpu.CompilerParams(
            dimension_semantics=("parallel",)),
    )(pos, mom)


# ------------- (N, D) row-convention boundary helpers (one-shot use) ----------

def _to_planar(X):
    """(N, D) -> (pos, mom) planar (P, R, 128) arrays; pads N to a 128 multiple once."""
    N, D = X.shape
    n_pad = (-N) % 128
    Xp = jnp.pad(X, ((0, n_pad), (0, 0))) if n_pad else X
    R = (N + n_pad) // 128
    planes = Xp.T.reshape(D, R, 128)
    if D > 2:
        pos = jnp.stack([planes[0], planes[2]], axis=0)
        mom = jnp.stack([planes[1], planes[3]], axis=0)
    else:
        pos = planes[0:1]
        mom = planes[1:2]
    return pos, mom


def _from_planar_momenta(X, new_mom):
    """Scatter updated momentum planes back into the (N, D) row convention."""
    N, D = X.shape
    mom_flat = new_mom.reshape(new_mom.shape[0], -1)[:, :N]
    U = X.at[:, 1].set(mom_flat[0])
    if D > 2:
        U = U.at[:, 3].set(mom_flat[1])
    return U


def multipole_chain_transform(X, elements):
    """Fused chain of kicks in the PyTorch (N, D) convention (one-shot wrapper).

    In a simulation loop, keep the state planar and call
    `multipole_kicks_planar` directly — the layout conversion here is an
    extra HBM pass that should be hoisted to the beamline boundary.
    """
    pos, mom = _to_planar(X)
    new_mom = multipole_kicks_planar(pos, mom, elements)
    return _from_planar_momenta(X, new_mom)


def multipole_transform(X, *, order, strength, skew=False):
    """Single-element forward, matching MultipoleTransform.forward semantics."""
    return multipole_chain_transform(
        X, [(int(order), float(strength), bool(skew))])


# TODO(synk): inverse()/reverse_momentum (sign-flip + forward + sign-flip) not
# implemented; forward pass only.


# ---------------------------- verification reference --------------------------

def _reference(X, *, order, strength, skew=False):
    """Plain-JAX reproduction of the PyTorch forward for verification."""
    N, D = X.shape
    x = X[:, 0]
    y = X[:, 2] if D > 2 else 0.0 * X[:, 0]
    if order == 3:
        zn_real = x ** 2 - y ** 2
        zn_imag = 2.0 * x * y
    elif order == 4:
        zn_real = x ** 3 - 3.0 * y ** 2 * x
        zn_imag = -(y ** 3) + 3.0 * x ** 2 * y
    elif order == 5:
        zn_real = x ** 4 - 6.0 * x ** 2 * y ** 2 + y ** 4
        zn_imag = 4.0 * x ** 3 * y - 4.0 * x * y ** 3
    else:
        raise ValueError
    k = strength / math.factorial(order - 1)
    U = X
    if skew:
        U = U.at[:, 1].set(X[:, 1] + k * zn_imag)
        if D > 2:
            U = U.at[:, 3].set(X[:, 3] + k * zn_real)
    else:
        U = U.at[:, 1].set(X[:, 1] - k * zn_real)
        if D > 2:
            U = U.at[:, 3].set(X[:, 1] + k * zn_imag)   # matches reference (X[:, 1])
    return U


if __name__ == "__main__":
    key = jax.random.PRNGKey(0)
    N, D = 512, 6
    X = 0.01 * jax.random.normal(key, (N, D), dtype=jnp.float32)

    # --- single elements via the PyTorch (N, D) convention wrapper ---
    configs = [(3, 1.5, False), (4, 0.7, True), (5, -0.9, False)]
    for order, strength, skew in configs:
        U = jax.block_until_ready(
            multipole_transform(X, order=order, strength=strength, skew=skew))
        U_ref = _reference(X, order=order, strength=strength, skew=skew)
        assert U.shape == X.shape and U.dtype == X.dtype
        assert jnp.allclose(U, U_ref, atol=1e-6, rtol=1e-6), (order, strength, skew)

    # --- fused chain, persistent planar layout, in-place momenta, under jit ---
    # N chosen so R=10 is not a multiple of tile_r=8 -> exercises the masked
    # partial last block (no jnp.pad on the hot path).
    N2 = 1280
    X2 = 0.01 * jax.random.normal(jax.random.PRNGKey(1), (N2, D), dtype=jnp.float32)
    pos, mom = _to_planar(X2)
    chain = jax.jit(lambda p, m: multipole_kicks_planar(p, m, tuple(configs)))
    new_mom = jax.block_until_ready(chain(pos, mom))
    U_chain = _from_planar_momenta(X2, new_mom)
    U_chain_ref = X2
    for order, strength, skew in configs:
        U_chain_ref = _reference(U_chain_ref, order=order, strength=strength, skew=skew)
    assert jnp.allclose(U_chain, U_chain_ref, atol=1e-6, rtol=1e-6)

    # --- 2D (x, px only) phase space path ---
    X3 = 0.01 * jax.random.normal(jax.random.PRNGKey(2), (256, 2), dtype=jnp.float32)
    U3 = jax.block_until_ready(
        multipole_transform(X3, order=3, strength=2.0, skew=False))
    U3_ref = _reference(X3, order=3, strength=2.0, skew=False)
    assert jnp.allclose(U3, U3_ref, atol=1e-6, rtol=1e-6)

    # --- non-128-multiple N (pad happens once at the layout boundary) ---
    X4 = 0.01 * jax.random.normal(jax.random.PRNGKey(3), (300, 4), dtype=jnp.float32)
    U4 = jax.block_until_ready(
        multipole_transform(X4, order=4, strength=1.1, skew=True))
    U4_ref = _reference(X4, order=4, strength=1.1, skew=True)
    assert jnp.allclose(U4, U4_ref, atol=1e-6, rtol=1e-6)

    print("KERNEL_OK")
</pallas_src>

<mosaic_0001>
module attributes {stable_mosaic.version = 11 : i64} {
  func.func @_multipole_kernel(%arg0: i32, %arg1: memref<2x4x128xf32, #tpu.memory_space<vmem>>, %arg2: memref<2x4x128xf32, #tpu.memory_space<vmem>>, %arg3: memref<2x4x128xf32, #tpu.memory_space<vmem>>) attributes {dimension_semantics = [#tpu.dimension_semantics<parallel>], iteration_bounds = array<i64: 1>, scalar_prefetch = 0 : i64, scratch_operands = 0 : i64, tpu.core_type = #tpu.core_type<tc>, window_params = [{transform_indices = @transform_0, window_bounds = array<i64: 2, 4, 128>}, {transform_indices = @transform_1, window_bounds = array<i64: 2, 4, 128>}, {transform_indices = @transform_2, window_bounds = array<i64: 2, 4, 128>}]} {
    %c0 = arith.constant 0 : index
    %c0_0 = arith.constant 0 : index
    %c0_1 = arith.constant 0 : index
    %0 = vector.load %arg1[%c0, %c0_0, %c0_1] : memref<2x4x128xf32, #tpu.memory_space<vmem>>, vector<1x4x128xf32>
    %1 = vector.shape_cast %0 : vector<1x4x128xf32> to vector<4x128xf32>
    %c0_2 = arith.constant 0 : index
    %c0_3 = arith.constant 0 : index
    %c0_4 = arith.constant 0 : index
    %2 = vector.load %arg2[%c0_2, %c0_3, %c0_4] : memref<2x4x128xf32, #tpu.memory_space<vmem>>, vector<1x4x128xf32>
    %3 = vector.shape_cast %2 : vector<1x4x128xf32> to vector<4x128xf32>
    %c1 = arith.constant 1 : index
    %c0_5 = arith.constant 0 : index
    %c0_6 = arith.constant 0 : index
    %4 = vector.load %arg1[%c1, %c0_5, %c0_6] : memref<2x4x128xf32, #tpu.memory_space<vmem>>, vector<1x4x128xf32>
    %5 = vector.shape_cast %4 : vector<1x4x128xf32> to vector<4x128xf32>
    %6 = arith.mulf %1, %1 : vector<4x128xf32>
    %7 = arith.mulf %5, %5 : vector<4x128xf32>
    %8 = arith.subf %6, %7 : vector<4x128xf32>
    %cst = arith.constant 2.000000e+00 : f32
    %9 = vector.broadcast %cst : f32 to vector<4x128xf32>
    %10 = arith.mulf %9, %1 : vector<4x128xf32>
    %11 = arith.mulf %10, %5 : vector<4x128xf32>
    %cst_7 = arith.constant 7.500000e-01 : f32
    %12 = vector.broadcast %cst_7 : f32 to vector<4x128xf32>
    %13 = arith.mulf %12, %11 : vector<4x128xf32>
    %14 = arith.addf %3, %13 : vector<4x128xf32>
    %cst_8 = arith.constant 7.500000e-01 : f32
    %15 = vector.broadcast %cst_8 : f32 to vector<4x128xf32>
    %16 = arith.mulf %15, %8 : vector<4x128xf32>
    %17 = arith.subf %3, %16 : vector<4x128xf32>
    %c0_9 = arith.constant 0 : index
    %c0_10 = arith.constant 0 : index
    %c0_11 = arith.constant 0 : index
    %18 = vector.load %arg3[%c0_9, %c0_10, %c0_11] : memref<2x4x128xf32, #tpu.memory_space<vmem>>, vector<1x4x128xf32>
    %19 = vector.shape_cast %18 : vector<1x4x128xf32> to vector<4x128xf32>
    %20 = vector.shape_cast %17 : vector<4x128xf32> to vector<1x4x128xf32>
    tpu.vector_store %arg3[%c0_9, %c0_10, %c0_11], %20 {strides = array<i32>} : memref<2x4x128xf32, #tpu.memory_space<vmem>>, vector<1x4x128xf32>,
    %c1_12 = arith.constant 1 : index
    %c0_13 = arith.constant 0 : index
    %c0_14 = arith.constant 0 : index
    %21 = vector.load %arg3[%c1_12, %c0_13, %c0_14] : memref<2x4x128xf32, #tpu.memory_space<vmem>>, vector<1x4x128xf32>
    %22 = vector.shape_cast %21 : vector<1x4x128xf32> to vector<4x128xf32>
    %23 = vector.shape_cast %14 : vector<4x128xf32> to vector<1x4x128xf32>
    tpu.vector_store %arg3[%c1_12, %c0_13, %c0_14], %23 {strides = array<i32>} : memref<2x4x128xf32, #tpu.memory_space<vmem>>, vector<1x4x128xf32>,
    return
  }
  func.func @transform_0(%arg0: i32) -> (i32, i32, i32) {
    %c0_i32 = arith.constant 0 : i32
    %c0_i32_0 = arith.constant 0 : i32
    %c0_i32_1 = arith.constant 0 : i32
    return %c0_i32, %arg0, %c0_i32_0 : i32, i32, i32
  }
  func.func @transform_1(%arg0: i32) -> (i32, i32, i32) {
    %c0_i32 = arith.constant 0 : i32
    %c0_i32_0 = arith.constant 0 : i32
    %c0_i32_1 = arith.constant 0 : i32
    return %c0_i32, %arg0, %c0_i32_0 : i32, i32, i32
  }
  func.func @transform_2(%arg0: i32) -> (i32, i32, i32) {
    %c0_i32 = arith.constant 0 : i32
    %c0_i32_0 = arith.constant 0 : i32
    %c0_i32_1 = arith.constant 0 : i32
    return %c0_i32, %arg0, %c0_i32_0 : i32, i32, i32
  }
}

</mosaic_0001>

<llo_original>
// kernel: tpu_custom_call.1
$region0: #{tpu_custom_call.1}
  #allocation0 [shape = 'u32[]', space=smem, size = 0x4, offset = 0x4, fixed_abs, tag = 'smem constant byte address 0x4 - core index']
  #allocation1 [shape = 'u32[72,128]{1,0:T(1,128)}', space=vmem, size = 0x9000, scoped, tag = 'internal scratch']
  %s0 = inlined_call_operand.vmem [shape: f32[2,4,128], index: 0, kind: input, shape index: {}]
  %s1 = inlined_call_operand.hbm [shape: f32[2,4,128], index: 1, kind: input, shape index: {}, may-alias: {1,2}]
  %s2 = inlined_call_operand.hbm [shape: f32[2,4,128], index: 2, kind: output, shape index: {}, may-alias: {1,2}]
  %s3 = sld [smem:[#allocation0]]
  $region22: #{tpu_custom_call.1} parent=0
    _
  %s5 = ssub.s32 1, %s3
  %s6 = scalar_select 0, %s5, %s3
  $region1: #{tpu_custom_call.1} parent=0
    #allocation2 [shape = 'u8[4096]{0}', space=vmem, size = 0x1000, scoped, tag = 'input window, operand 1, single buffered']
    #allocation3 [shape = 's32[1]{0}', space=sflag, size = 0x4, scoped, tag = 'scoped memory for tpu_custom_call.1']
    #allocation4 [shape = 's32[1]{0}', space=sflag, size = 0x4, scoped, tag = 'scoped memory for tpu_custom_call.1']
    #allocation5 [shape = 'u8[4096]{0}', space=vmem, size = 0x1000, scoped, tag = 'output window, operand 0, single buffered']
    %7 = vsyncpa [#allocation3], 0
    %8 = vsyncpa [#allocation4], 0
    // Predicated region
    $region2: #{tpu_custom_call.1} parent=1 // pred_check
      _
    $region3: #{tpu_custom_call.1} parent=1 // pred_check_branch
      %10 = sbr.rel (0) target = $region5
    $region4: #{tpu_custom_call.1} parent=1 // pred_region
      _
    $region5: #{tpu_custom_call.1} parent=1 // pred_fallthru
      _
    // Predicated region
    $region6: #{tpu_custom_call.1} parent=1 // pred_check
      _
    $region7: #{tpu_custom_call.1} parent=1 // pred_check_branch
      %12 = sbr.rel (0) target = $region9
    $region8: #{tpu_custom_call.1} parent=1 // pred_region
      %14 = vsyncadd [#allocation3], 0
      %s15 = sshll.u32 %s1, 4
      %s16 = int_to_ptr.hbm [resolvable:$true] %s15
      %s17 = sshll.u32 [#allocation2], 4
      %s18 = int_to_ptr.vmem [resolvable:$true] %s17
      %23 = dma.hbm_to_vmem [thread:$0]  %s16, 128, %s18, [#allocation3], 64, 64, 4
    $region9: #{tpu_custom_call.1} parent=1 // pred_fallthru
      _
    // Predicated region
    $region10: #{tpu_custom_call.1} parent=1 // pred_check
      _
    $region11: #{tpu_custom_call.1} parent=1 // pred_check_branch
      %25 = sbr.rel (0) target = $region13
    $region12: #{tpu_custom_call.1} parent=1 // pred_region
      %27 = dma.done [#allocation3], 128
    $region13: #{tpu_custom_call.1} parent=1 // pred_fallthru
      _
    %v28 = vld [vmem:[%s0] sm:$0xf]
    %v29 = vld [vmem:[#allocation2] sm:$0xf]
    %s30 = scalar_lea.vmem %s0, 4
    %v31 = vld [vmem:[%s30] sm:$0xf]
    %v32 = vmul.f32 %v28, %v28
    %v33 = vmul.f32 %v31, %v31
    %v34 = vsub.f32 %v32, %v33
    %v35 = vmul.f32 %v28, 2.0
    %v36 = vmul.f32 %v35, %v31
    %v37 = vmul.f32 %v36, 0.75
    %v38 = vadd.f32 %v29, %v37
    %v39 = vmul.f32 %v34, 0.75
    %v40 = vsub.f32 %v29, %v39
    %41 = vst [vmem:[#allocation5] sm:$0xf] %v40
    %s42 = scalar_lea.vmem [#allocation5], 4
    %43 = vst [vmem:[%s42] sm:$0xf] %v38
    // Predicated region
    $region14: #{tpu_custom_call.1} parent=1 // pred_check
      _
    $region15: #{tpu_custom_call.1} parent=1 // pred_check_branch
      %45 = sbr.rel (0) target = $region17
    $region16: #{tpu_custom_call.1} parent=1 // pred_region
      %47 = vsyncadd [#allocation4], 0
      %s48 = sshll.u32 [#allocation5], 4
      %s49 = int_to_ptr.vmem [resolvable:$true] %s48
      %s50 = sshll.u32 %s2, 4
      %s51 = int_to_ptr.hbm [resolvable:$true] %s50
      %56 = dma.vmem_to_hbm [thread:$0]  %s49, 128, %s51, [#allocation4], 64, 64, 4
    $region17: #{tpu_custom_call.1} parent=1 // pred_fallthru
      _
    // Predicated region
    $region18: #{tpu_custom_call.1} parent=1 // pred_check
      _
    $region19: #{tpu_custom_call.1} parent=1 // pred_check_branch
      %58 = sbr.rel (0) target = $region21
    $region20: #{tpu_custom_call.1} parent=1 // pred_region
      %60 = dma.done [#allocation4], 128
    $region21: #{tpu_custom_call.1} parent=1 // pred_fallthru
      _
    %61 = vsyncpa [#allocation3], 1
    %62 = vsyncpa [#allocation4], 1

</llo_original>
